<compile_context>
chip_gen: v6e
topology: v6e:2x2x1
jax: 0.10.0
libtpu: 0.0.40
codegen_flags: <defaults>
</compile_context>

<pallas_src>
import functools

import jax
import jax.numpy as jnp
from jax.experimental import pallas as pl
from jax.experimental.pallas import tpu as pltpu


HIDDEN = 32       # logical hidden size (matches nn.Linear(..., 32))
H_PAD = 128       # hidden padded to full lane width
A_PAD = 128       # action dim padded so the output store is an unmasked, lane-dense vst
TM_MAX = 2048     # review: sweep batch tile in the 1024-2048 range; VMEM stays small


def _round_up(x, m):
    return (x + m - 1) // m * m


def _slab_offsets(state_dims):
    """Row offsets of each packed tensor inside the (K_total, 128) weight slab."""
    sd_pad = _round_up(max(state_dims, 1), 8)
    w1_off = 0
    b1_off = w1_off + sd_pad      # 8-row block, only row 0 used
    w2_off = b1_off + 8
    b2_off = w2_off + H_PAD
    w3_off = b2_off + 8
    b3_off = w3_off + H_PAD
    total = b3_off + 8            # every block is a multiple of 8 rows
    return sd_pad, (w1_off, b1_off, w2_off, b2_off, w3_off, b3_off), total


def _choose_tm(B):
    """Adaptive batch tile (perf review items 1, 2, 6):
      * small batch  -> single tile = round_up(B, 8): zero padding waste, one grid step.
      * large batch  -> biggest tile <= TM_MAX that (a) leaves >= 2 grid steps so both
        v7x TensorCores get sharded work and (b) bounds row-padding waste to ~12.5%.
    """
    B8 = _round_up(B, 8)
    if B8 < TM_MAX:
        return B8
    for tm in (2048, 1024, 512, 256, 128, 64, 32, 16, 8):
        b_pad = _round_up(B8, tm)
        if (b_pad // tm) >= 2 and (b_pad - B8) * 8 <= B8:   # waste <= 12.5%
            return tm
    return 8


def _mlp_kernel(x_ref, w_ref, o_ref, *, sd_pad, offs):
    """Fused Linear->ReLU->Linear->ReLU->Linear on one (TM, sd_pad) batch tile.

    Emits raw lane-dense logits; softmax runs in the wrapper on the real
    (B, num_actions) columns (review item 4a).
    """
    w1_off, b1_off, w2_off, b2_off, w3_off, b3_off = offs

    x = x_ref[...]                                             # (TM, sd_pad) f32

    # layer 1: Linear + ReLU (weights sliced statically out of the resident slab)
    w1 = w_ref[w1_off:w1_off + sd_pad, :]
    b1 = w_ref[b1_off:b1_off + 1, :]
    h1 = jnp.maximum(jnp.dot(x, w1, preferred_element_type=jnp.float32) + b1, 0.0)

    # layer 2: Linear + ReLU
    w2 = w_ref[w2_off:w2_off + H_PAD, :]
    b2 = w_ref[b2_off:b2_off + 1, :]
    h2 = jnp.maximum(jnp.dot(h1, w2, preferred_element_type=jnp.float32) + b2, 0.0)

    # layer 3: Linear -> logits (padded action columns carry zero weight/bias;
    # they are sliced away before the wrapper softmax, so no -inf trick needed)
    w3 = w_ref[w3_off:w3_off + H_PAD, :]
    b3 = w_ref[b3_off:b3_off + 1, :]
    o_ref[...] = jnp.dot(h2, w3, preferred_element_type=jnp.float32) + b3


@functools.partial(jax.jit, static_argnames=("num_actions",))
def pi_forward(states, slab, *, num_actions):
    """Forward pass of PiApproximationWithNN (return_prob=True semantics).

    states: (B, state_dims) float32
    slab:   packed/padded weight slab from pack_params()
    returns: (B, num_actions) float32 action probabilities.
    """
    B, state_dims = states.shape
    sd_pad, offs, total = _slab_offsets(state_dims)

    TM = _choose_tm(B)
    B_pad = _round_up(B, TM)

    x = states.astype(jnp.float32)
    if B_pad != B or sd_pad != state_dims:
        x = jnp.pad(x, ((0, B_pad - B), (0, sd_pad - state_dims)))

    kernel = functools.partial(_mlp_kernel, sd_pad=sd_pad, offs=offs)
    logits = pl.pallas_call(
        kernel,
        out_shape=jax.ShapeDtypeStruct((B_pad, A_PAD), jnp.float32),
        grid=(B_pad // TM,),
        in_specs=[
            # batch tiles stream through VMEM (double-buffered DMA overlaps compute)
            pl.BlockSpec((TM, sd_pad), lambda i: (i, 0)),
            # single weight slab, same block every step -> stays VMEM-resident
            pl.BlockSpec((total, 128), lambda i: (0, 0)),
        ],
        out_specs=pl.BlockSpec((TM, A_PAD), lambda i: (i, 0)),
        compiler_params=pltpu.CompilerParams(
            # independent batch tiles -> megacore sharding on v7x's 2 TensorCores
            dimension_semantics=("parallel",),
            # VMEM footprint at TM=2048 is ~5 MiB (blocks + f32 intermediates),
            # well under every generation's scoped default, so no vmem_limit needed.
        ),
    )(x, slab)

    # Review 4a: softmax on the real columns in the wrapper. The slice + softmax fuse
    # into one XLA pass over only num_actions lanes per row, removing the in-kernel
    # exp over (TM, 128) padded vregs entirely.
    return jax.nn.softmax(logits[:B, :num_actions], axis=-1)


def pack_params(params, state_dims, num_actions, hidden=HIDDEN):
    """Pack w1/b1/w2/b2/w3/b3 into one zero-padded, lane-dense (K_total, 128) slab."""
    # Correctness guards (review): silent truncation would otherwise occur.
    assert num_actions <= A_PAD, f"num_actions must be <= {A_PAD}"
    assert hidden <= H_PAD, f"hidden must be <= {H_PAD}"
    sd_pad, (w1_off, b1_off, w2_off, b2_off, w3_off, b3_off), total = _slab_offsets(state_dims)
    slab = jnp.zeros((total, 128), jnp.float32)
    slab = slab.at[w1_off:w1_off + state_dims, :hidden].set(params["w1"])
    slab = slab.at[b1_off, :hidden].set(params["b1"].reshape(-1))
    slab = slab.at[w2_off:w2_off + hidden, :hidden].set(params["w2"])
    slab = slab.at[b2_off, :hidden].set(params["b2"].reshape(-1))
    slab = slab.at[w3_off:w3_off + hidden, :num_actions].set(params["w3"])
    slab = slab.at[b3_off, :num_actions].set(params["b3"].reshape(-1))
    return slab


def init_params(key, state_dims, num_actions, hidden=HIDDEN):
    """Deterministic init matching nn.Linear shapes (weights stored as (in, out))."""
    def linear(k, fan_in, fan_out):
        kw, kb = jax.random.split(k)
        bound = 1.0 / jnp.sqrt(fan_in)
        # PyTorch nn.Linear default: U(-1/sqrt(fan_in), 1/sqrt(fan_in)) for W and b.
        w = jax.random.uniform(kw, (fan_in, fan_out), jnp.float32, -bound, bound)
        b = jax.random.uniform(kb, (1, fan_out), jnp.float32, -bound, bound)
        return w, b

    k1, k2, k3 = jax.random.split(key, 3)
    w1, b1 = linear(k1, state_dims, hidden)
    w2, b2 = linear(k2, hidden, hidden)
    w3, b3 = linear(k3, hidden, num_actions)
    return {"w1": w1, "b1": b1, "w2": w2, "b2": b2, "w3": w3, "b3": b3}


def _reference(states, p):
    h1 = jnp.maximum(states @ p["w1"] + p["b1"], 0.0)
    h2 = jnp.maximum(h1 @ p["w2"] + p["b2"], 0.0)
    logits = h2 @ p["w3"] + p["b3"]
    return jax.nn.softmax(logits, axis=-1)


if __name__ == "__main__":
    key = jax.random.PRNGKey(0)
    k_params, k_states = jax.random.split(key)

    state_dims = 4      # e.g. CartPole observation
    num_actions = 2

    params = init_params(k_params, state_dims, num_actions)
    slab = pack_params(params, state_dims, num_actions)

    # small batch: single-tile path
    states = jax.random.normal(k_states, (8, state_dims), jnp.float32)
    probs = pi_forward(states, slab, num_actions=num_actions)
    jax.block_until_ready(probs)
    ref = _reference(states, params)
    assert probs.shape == (8, num_actions)
    assert jnp.allclose(probs, ref, atol=1e-5, rtol=1e-5)
    assert jnp.allclose(jnp.sum(probs, axis=-1), 1.0, atol=1e-5)

    # awkward larger batch: exercises the adaptive tile (TM=256 here), multi-step
    # "parallel" grid, and bounded (<~6%) row-padding waste
    states_big = jax.random.normal(jax.random.PRNGKey(1), (2176, state_dims), jnp.float32)
    probs_big = pi_forward(states_big, slab, num_actions=num_actions)
    jax.block_until_ready(probs_big)
    ref_big = _reference(states_big, params)
    assert probs_big.shape == (2176, num_actions)
    assert jnp.allclose(probs_big, ref_big, atol=1e-5, rtol=1e-5)

    # TODO(synk): np.random.choice action sampling (return_prob=False path) and the
    # Adam-based update() are host-side / training logic with no clean Pallas
    # equivalent; sample and optimize outside the kernel.
    print("KERNEL_OK")
</pallas_src>

<mosaic_0001>
module attributes {stable_mosaic.version = 11 : i64} {
  func.func @_mlp_kernel(%arg0: i32, %arg1: memref<8x8xf32, #tpu.memory_space<vmem>>, %arg2: memref<288x128xf32, #tpu.memory_space<vmem>>, %arg3: memref<8x128xf32, #tpu.memory_space<vmem>>) attributes {dimension_semantics = [#tpu.dimension_semantics<parallel>], iteration_bounds = array<i64: 1>, scalar_prefetch = 0 : i64, scratch_operands = 0 : i64, tpu.core_type = #tpu.core_type<tc>, window_params = [{transform_indices = @transform_0, window_bounds = array<i64: 8, 8>}, {pipeline_mode = #tpu.pipeline_mode<synchronous>, transform_indices = @transform_1, window_bounds = array<i64: 288, 128>}, {transform_indices = @transform_2, window_bounds = array<i64: 8, 128>}]} {
    %c0 = arith.constant 0 : index
    %c0_0 = arith.constant 0 : index
    %0 = vector.load %arg1[%c0, %c0_0] : memref<8x8xf32, #tpu.memory_space<vmem>>, vector<8x8xf32>
    %c0_1 = arith.constant 0 : index
    %c0_2 = arith.constant 0 : index
    %1 = vector.load %arg2[%c0_1, %c0_2] : memref<288x128xf32, #tpu.memory_space<vmem>>, vector<8x128xf32>
    %c8 = arith.constant 8 : index
    %c0_3 = arith.constant 0 : index
    %2 = vector.load %arg2[%c8, %c0_3] : memref<288x128xf32, #tpu.memory_space<vmem>>, vector<1x128xf32>
    %cst = arith.constant dense<0.000000e+00> : vector<8x128xf32>
    %3 = tpu.matmul %0, %1, %cst {dimension_numbers = #tpu.dot_dimension_numbers<[1], [0], [0], [1], [0, 0, 1, 1], [], []>} : vector<8x8xf32>, vector<8x128xf32>, vector<8x128xf32> -> vector<8x128xf32>
    %4 = vector.broadcast %2 : vector<1x128xf32> to vector<8x128xf32>
    %5 = arith.addf %3, %4 : vector<8x128xf32>
    %cst_4 = arith.constant 0.000000e+00 : f32
    %6 = vector.broadcast %cst_4 : f32 to vector<8x128xf32>
    %7 = arith.maximumf %5, %6 : vector<8x128xf32>
    %c16 = arith.constant 16 : index
    %c0_5 = arith.constant 0 : index
    %8 = vector.load %arg2[%c16, %c0_5] : memref<288x128xf32, #tpu.memory_space<vmem>>, vector<128x128xf32>
    %c144 = arith.constant 144 : index
    %c0_6 = arith.constant 0 : index
    %9 = vector.load %arg2[%c144, %c0_6] : memref<288x128xf32, #tpu.memory_space<vmem>>, vector<1x128xf32>
    %cst_7 = arith.constant dense<0.000000e+00> : vector<8x128xf32>
    %10 = tpu.matmul %7, %8, %cst_7 {dimension_numbers = #tpu.dot_dimension_numbers<[1], [0], [0], [1], [0, 0, 1, 1], [], []>} : vector<8x128xf32>, vector<128x128xf32>, vector<8x128xf32> -> vector<8x128xf32>
    %11 = vector.broadcast %9 : vector<1x128xf32> to vector<8x128xf32>
    %12 = arith.addf %10, %11 : vector<8x128xf32>
    %cst_8 = arith.constant 0.000000e+00 : f32
    %13 = vector.broadcast %cst_8 : f32 to vector<8x128xf32>
    %14 = arith.maximumf %12, %13 : vector<8x128xf32>
    %c152 = arith.constant 152 : index
    %c0_9 = arith.constant 0 : index
    %15 = vector.load %arg2[%c152, %c0_9] : memref<288x128xf32, #tpu.memory_space<vmem>>, vector<128x128xf32>
    %c280 = arith.constant 280 : index
    %c0_10 = arith.constant 0 : index
    %16 = vector.load %arg2[%c280, %c0_10] : memref<288x128xf32, #tpu.memory_space<vmem>>, vector<1x128xf32>
    %cst_11 = arith.constant dense<0.000000e+00> : vector<8x128xf32>
    %17 = tpu.matmul %14, %15, %cst_11 {dimension_numbers = #tpu.dot_dimension_numbers<[1], [0], [0], [1], [0, 0, 1, 1], [], []>} : vector<8x128xf32>, vector<128x128xf32>, vector<8x128xf32> -> vector<8x128xf32>
    %18 = vector.broadcast %16 : vector<1x128xf32> to vector<8x128xf32>
    %19 = arith.addf %17, %18 : vector<8x128xf32>
    %c0_12 = arith.constant 0 : index
    %c0_13 = arith.constant 0 : index
    %20 = vector.load %arg3[%c0_12, %c0_13] : memref<8x128xf32, #tpu.memory_space<vmem>>, vector<8x128xf32>
    tpu.vector_store %arg3[%c0_12, %c0_13], %19 {strides = array<i32>} : memref<8x128xf32, #tpu.memory_space<vmem>>, vector<8x128xf32>,
    return
  }
  func.func @transform_0(%arg0: i32) -> (i32, i32) {
    %c0_i32 = arith.constant 0 : i32
    %c0_i32_0 = arith.constant 0 : i32
    return %arg0, %c0_i32 : i32, i32
  }
  func.func @transform_1(%arg0: i32) -> (i32, i32) {
    %c0_i32 = arith.constant 0 : i32
    %c0_i32_0 = arith.constant 0 : i32
    %c0_i32_1 = arith.constant 0 : i32
    return %c0_i32, %c0_i32_0 : i32, i32
  }
  func.func @transform_2(%arg0: i32) -> (i32, i32) {
    %c0_i32 = arith.constant 0 : i32
    %c0_i32_0 = arith.constant 0 : i32
    return %arg0, %c0_i32 : i32, i32
  }
}

</mosaic_0001>

<llo_original>
// kernel: pi_forward.1
$region0: #{pi_forward.1}
  #allocation0 [shape = 'u32[]', space=smem, size = 0x4, offset = 0x4, fixed_abs, tag = 'smem constant byte address 0x4 - core index']
  #allocation1 [shape = 'u32[144,128]{1,0:T(1,128)}', space=vmem, size = 0x12000, scoped, tag = 'internal scratch']
  %s0 = inlined_call_operand.vmem [shape: f32[8,8], index: 0, kind: input, shape index: {}]
  %s1 = inlined_call_operand.hbm [shape: f32[288,128], index: 1, kind: input, shape index: {}]
  %s2 = inlined_call_operand.vmem [shape: f32[8,128], index: 2, kind: output, shape index: {}]
  %s3 = sld [smem:[#allocation0]]
  $region22: #{pi_forward.1} parent=0
    _
  %s5 = ssub.s32 1, %s3
  %s6 = scalar_select 0, %s5, %s3
  $region1: #{pi_forward.1} parent=0
    #allocation2 [shape = 'u8[147456]{0}', space=vmem, size = 0x24000, scoped, tag = 'input window, operand 1, single buffered']
    #allocation3 [shape = 's32[1]{0}', space=sflag, size = 0x4, scoped, tag = 'scoped memory for pi_forward.1']
    %7 = vsyncpa [#allocation3], 0
    // Predicated region
    $region2: #{pi_forward.1} parent=1 // pred_check
      _
    $region3: #{pi_forward.1} parent=1 // pred_check_branch
      %9 = sbr.rel (0) target = $region5
    $region4: #{pi_forward.1} parent=1 // pred_region
      _
    $region5: #{pi_forward.1} parent=1 // pred_fallthru
      _
    // Predicated region
    $region6: #{pi_forward.1} parent=1 // pred_check
      _
    $region7: #{pi_forward.1} parent=1 // pred_check_branch
      %11 = sbr.rel (0) target = $region9
    $region8: #{pi_forward.1} parent=1 // pred_region
      %s13 = ssub.s32 4608, 4608
      %14 = vsyncadd [#allocation3], %s13
      %s15 = sshll.u32 [#allocation2], 4
      %s16 = int_to_ptr.vmem [resolvable:$true] %s15
      %21 = dma.hbm_to_vmem [thread:$0]  %s1, 4608, %s16, [#allocation3], 128, 128, 8
    $region9: #{pi_forward.1} parent=1 // pred_fallthru
      _
    // Predicated region
    $region10: #{pi_forward.1} parent=1 // pred_check
      _
    $region11: #{pi_forward.1} parent=1 // pred_check_branch
      %23 = sbr.rel (0) target = $region13
    $region12: #{pi_forward.1} parent=1 // pred_region
      %24 = dma.done [#allocation3], 4608
    $region13: #{pi_forward.1} parent=1 // pred_fallthru
      _
    %v25 = vld [vmem:[%s0] sm:$0xff]
    %v26 = vld [vmem:[#allocation2] sm:$0xff]
    %v27 = vld [vmem:[#allocation2 + $0x8] sm:$0x1]
    %v28 = vlaneseq
    %v29 = vshrl.u32 %v28, 7
    %v30 = vsub.s32 0, %v29
    %v31 = vrot.slane %v27, %v30
    %vm32 = vcmask 64512
    %v34 = vsel %vm32, %v25, 0
    %36 = vmatprep.subr.mxu0 0.0
    %37 = vmatpush1.msra.mxu0 0.0
    %38 = vmatprep.subr.mxu0 0.0
    %39 = vmatpush1.msra.mxu0 0.0
    %40 = vmatprep.subr.mxu0 0.0
    %41 = vmatpush1.msra.mxu0 0.0
    %42 = vmatprep.subr.mxu0 0.0
    %43 = vmatpush1.msra.mxu0 0.0
    %44 = vmatprep.subr.mxu0 0.0
    %45 = vmatpush1.msra.mxu0 0.0
    %46 = vmatprep.subr.mxu0 0.0
    %47 = vmatpush1.msra.mxu0 0.0
    %48 = vmatprep.subr.mxu0 0.0
    %49 = vmatpush1.msra.mxu0 0.0
    %50 = vmatprep.subr.mxu0 0.0
    %51 = vmatpush1.msra.mxu0 0.0
    %52 = vmatprep.subr.mxu0 0.0
    %53 = vmatpush1.msra.mxu0 0.0
    %54 = vmatprep.subr.mxu0 0.0
    %55 = vmatpush1.msra.mxu0 0.0
    %56 = vmatprep.subr.mxu0 0.0
    %57 = vmatpush1.msra.mxu0 0.0
    %58 = vmatprep.subr.mxu0 0.0
    %59 = vmatpush1.msra.mxu0 0.0
    %60 = vmatprep.subr.mxu0 0.0
    %61 = vmatpush1.msra.mxu0 0.0
    %62 = vmatprep.subr.mxu0 0.0
    %63 = vmatpush1.msra.mxu0 0.0
    %64 = vmatprep.subr.mxu0 0.0
    %65 = vmatpush1.msra.mxu0 0.0
    %66 = vmatprep.subr.mxu0 0.0
    %67 = vmatpush1.msra.mxu0 %v26
    %68 = vmatprep.subr.mxu0 0.0
    %69 = vmatpush2.msra.mxu0 0.0
    %70 = vmatprep.subr.mxu0 0.0
    %71 = vmatpush2.msra.mxu0 0.0
    %72 = vmatprep.subr.mxu0 0.0
    %73 = vmatpush2.msra.mxu0 0.0
    %74 = vmatprep.subr.mxu0 0.0
    %75 = vmatpush2.msra.mxu0 0.0
    %76 = vmatprep.subr.mxu0 0.0
    %77 = vmatpush2.msra.mxu0 0.0
    %78 = vmatprep.subr.mxu0 0.0
    %79 = vmatpush2.msra.mxu0 0.0
    %80 = vmatprep.subr.mxu0 0.0
    %81 = vmatpush2.msra.mxu0 0.0
    %82 = vmatprep.subr.mxu0 0.0
    %83 = vmatpush2.msra.mxu0 0.0
    %84 = vmatprep.subr.mxu0 0.0
    %85 = vmatpush2.msra.mxu0 0.0
    %86 = vmatprep.subr.mxu0 0.0
    %87 = vmatpush2.msra.mxu0 0.0
    %88 = vmatprep.subr.mxu0 0.0
    %89 = vmatpush2.msra.mxu0 0.0
    %90 = vmatprep.subr.mxu0 0.0
    %91 = vmatpush2.msra.mxu0 0.0
    %92 = vmatprep.subr.mxu0 0.0
    %93 = vmatpush2.msra.mxu0 0.0
    %94 = vmatprep.subr.mxu0 0.0
    %95 = vmatpush2.msra.mxu0 0.0
    %96 = vmatprep.subr.mxu0 0.0
    %97 = vmatpush2.msra.mxu0 0.0
    %98 = vmatprep.subr.mxu0 0.0
    %99 = vmatpush2.msra.mxu0 0.0
    %100 = vmatprep.mubr.f32.mxu0 0.0
    %101 = vmatmul.mubr.f32.gmra.mxu0 %v34
    %v102 = vpop.f32.mrf.mxu0
    %v103 = vadd.f32 %v31, %v102
    %v104 = vpop.f32.mrf.mxu0
    %105 = vdwg.mxu0
    %v106 = vmax.f32 %v103, 0.0
    %v107 = vld [vmem:[#allocation2 + $0x10] sm:$0xff]
    %v108 = vld [vmem:[#allocation2 + $0x18] sm:$0xff]
    %v109 = vld [vmem:[#allocation2 + $0x20] sm:$0xff]
    %v110 = vld [vmem:[#allocation2 + $0x28] sm:$0xff]
    %v111 = vld [vmem:[#allocation2 + $0x30] sm:$0xff]
    %v112 = vld [vmem:[#allocation2 + $0x38] sm:$0xff]
    %v113 = vld [vmem:[#allocation2 + $0x40] sm:$0xff]
    %v114 = vld [vmem:[#allocation2 + $0x48] sm:$0xff]
    %v115 = vld [vmem:[#allocation2 + $0x50] sm:$0xff]
    %v116 = vld [vmem:[#allocation2 + $0x58] sm:$0xff]
    %v117 = vld [vmem:[#allocation2 + $0x60] sm:$0xff]
    %v118 = vld [vmem:[#allocation2 + $0x68] sm:$0xff]
    %v119 = vld [vmem:[#allocation2 + $0x70] sm:$0xff]
    %v120 = vld [vmem:[#allocation2 + $0x78] sm:$0xff]
    %v121 = vld [vmem:[#allocation2 + $0x80] sm:$0xff]
    %v122 = vld [vmem:[#allocation2 + $0x88] sm:$0xff]
    %v123 = vld [vmem:[#allocation2 + $0x90] sm:$0x1]
    %v124 = vlaneseq
    %v125 = vshrl.u32 %v124, 7
    %v126 = vsub.s32 0, %v125
    %v127 = vrot.slane %v123, %v126
    %128 = vmatprep.subr.mxu0 0.0
    %129 = vmatpush1.msra.mxu0 %v122
    %130 = vmatprep.subr.mxu0 0.0
    %131 = vmatpush1.msra.mxu0 %v121
    %132 = vmatprep.subr.mxu0 0.0
    %133 = vmatpush1.msra.mxu0 %v120
    %134 = vmatprep.subr.mxu0 0.0
    %135 = vmatpush1.msra.mxu0 %v119
    %136 = vmatprep.subr.mxu0 0.0
    %137 = vmatpush1.msra.mxu0 %v118
    %138 = vmatprep.subr.mxu0 0.0
    %139 = vmatpush1.msra.mxu0 %v117
    %140 = vmatprep.subr.mxu0 0.0
    %141 = vmatpush1.msra.mxu0 %v116
    %142 = vmatprep.subr.mxu0 0.0
    %143 = vmatpush1.msra.mxu0 %v115
    %144 = vmatprep.subr.mxu0 0.0
    %145 = vmatpush1.msra.mxu0 %v114
    %146 = vmatprep.subr.mxu0 0.0
    %147 = vmatpush1.msra.mxu0 %v113
    %148 = vmatprep.subr.mxu0 0.0
    %149 = vmatpush1.msra.mxu0 %v112
    %150 = vmatprep.subr.mxu0 0.0
    %151 = vmatpush1.msra.mxu0 %v111
    %152 = vmatprep.subr.mxu0 0.0
    %153 = vmatpush1.msra.mxu0 %v110
    %154 = vmatprep.subr.mxu0 0.0
    %155 = vmatpush1.msra.mxu0 %v109
    %156 = vmatprep.subr.mxu0 0.0
    %157 = vmatpush1.msra.mxu0 %v108
    %158 = vmatprep.subr.mxu0 0.0
    %159 = vmatpush1.msra.mxu0 %v107
    %160 = vmatprep.subr.mxu0 0.0
    %161 = vmatpush2.msra.mxu0 0.0
    %162 = vmatprep.subr.mxu0 0.0
    %163 = vmatpush2.msra.mxu0 0.0
    %164 = vmatprep.subr.mxu0 0.0
    %165 = vmatpush2.msra.mxu0 0.0
    %166 = vmatprep.subr.mxu0 0.0
    %167 = vmatpush2.msra.mxu0 0.0
    %168 = vmatprep.subr.mxu0 0.0
    %169 = vmatpush2.msra.mxu0 0.0
    %170 = vmatprep.subr.mxu0 0.0
    %171 = vmatpush2.msra.mxu0 0.0
    %172 = vmatprep.subr.mxu0 0.0
    %173 = vmatpush2.msra.mxu0 0.0
    %174 = vmatprep.subr.mxu0 0.0
    %175 = vmatpush2.msra.mxu0 0.0
    %176 = vmatprep.subr.mxu0 0.0
    %177 = vmatpush2.msra.mxu0 0.0
    %178 = vmatprep.subr.mxu0 0.0
    %179 = vmatpush2.msra.mxu0 0.0
    %180 = vmatprep.subr.mxu0 0.0
    %181 = vmatpush2.msra.mxu0 0.0
    %182 = vmatprep.subr.mxu0 0.0
    %183 = vmatpush2.msra.mxu0 0.0
    %184 = vmatprep.subr.mxu0 0.0
    %185 = vmatpush2.msra.mxu0 0.0
    %186 = vmatprep.subr.mxu0 0.0
    %187 = vmatpush2.msra.mxu0 0.0
    %188 = vmatprep.subr.mxu0 0.0
    %189 = vmatpush2.msra.mxu0 0.0
    %190 = vmatprep.subr.mxu0 0.0
    %191 = vmatpush2.msra.mxu0 0.0
    %192 = vmatprep.mubr.f32.mxu0 0.0
    %193 = vmatmul.mubr.f32.gmra.mxu0 %v106
    %v194 = vpop.f32.mrf.mxu0
    %v195 = vadd.f32 %v127, %v194
    %v196 = vpop.f32.mrf.mxu0
    %197 = vdwg.mxu0
    %v198 = vmax.f32 %v195, 0.0
    %v199 = vld [vmem:[#allocation2 + $0x98] sm:$0xff]
    %v200 = vld [vmem:[#allocation2 + $0xa0] sm:$0xff]
    %v201 = vld [vmem:[#allocation2 + $0xa8] sm:$0xff]
    %v202 = vld [vmem:[#allocation2 + $0xb0] sm:$0xff]
    %v203 = vld [vmem:[#allocation2 + $0xb8] sm:$0xff]
    %v204 = vld [vmem:[#allocation2 + $0xc0] sm:$0xff]
    %v205 = vld [vmem:[#allocation2 + $0xc8] sm:$0xff]
    %v206 = vld [vmem:[#allocation2 + $0xd0] sm:$0xff]
    %v207 = vld [vmem:[#allocation2 + $0xd8] sm:$0xff]
    %v208 = vld [vmem:[#allocation2 + $0xe0] sm:$0xff]
    %v209 = vld [vmem:[#allocation2 + $0xe8] sm:$0xff]
    %v210 = vld [vmem:[#allocation2 + $0xf0] sm:$0xff]
    %v211 = vld [vmem:[#allocation2 + $0xf8] sm:$0xff]
    %v212 = vld [vmem:[#allocation2 + $0x100] sm:$0xff]
    %v213 = vld [vmem:[#allocation2 + $0x108] sm:$0xff]
    %v214 = vld [vmem:[#allocation2 + $0x110] sm:$0xff]
    %v215 = vld [vmem:[#allocation2 + $0x118] sm:$0x1]
    %v216 = vlaneseq
    %v217 = vshrl.u32 %v216, 7
    %v218 = vsub.s32 0, %v217
    %v219 = vrot.slane %v215, %v218
    %220 = vmatprep.subr.mxu0 0.0
    %221 = vmatpush1.msra.mxu0 %v214
    %222 = vmatprep.subr.mxu0 0.0
    %223 = vmatpush1.msra.mxu0 %v213
    %224 = vmatprep.subr.mxu0 0.0
    %225 = vmatpush1.msra.mxu0 %v212
    %226 = vmatprep.subr.mxu0 0.0
    %227 = vmatpush1.msra.mxu0 %v211
    %228 = vmatprep.subr.mxu0 0.0
    %229 = vmatpush1.msra.mxu0 %v210
    %230 = vmatprep.subr.mxu0 0.0
    %231 = vmatpush1.msra.mxu0 %v209
    %232 = vmatprep.subr.mxu0 0.0
    %233 = vmatpush1.msra.mxu0 %v208
    %234 = vmatprep.subr.mxu0 0.0
    %235 = vmatpush1.msra.mxu0 %v207
    %236 = vmatprep.subr.mxu0 0.0
    %237 = vmatpush1.msra.mxu0 %v206
    %238 = vmatprep.subr.mxu0 0.0
    %239 = vmatpush1.msra.mxu0 %v205
    %240 = vmatprep.subr.mxu0 0.0
    %241 = vmatpush1.msra.mxu0 %v204
    %242 = vmatprep.subr.mxu0 0.0
    %243 = vmatpush1.msra.mxu0 %v203
    %244 = vmatprep.subr.mxu0 0.0
    %245 = vmatpush1.msra.mxu0 %v202
    %246 = vmatprep.subr.mxu0 0.0
    %247 = vmatpush1.msra.mxu0 %v201
    %248 = vmatprep.subr.mxu0 0.0
    %249 = vmatpush1.msra.mxu0 %v200
    %250 = vmatprep.subr.mxu0 0.0
    %251 = vmatpush1.msra.mxu0 %v199
    %252 = vmatprep.subr.mxu0 0.0
    %253 = vmatpush2.msra.mxu0 0.0
    %254 = vmatprep.subr.mxu0 0.0
    %255 = vmatpush2.msra.mxu0 0.0
    %256 = vmatprep.subr.mxu0 0.0
    %257 = vmatpush2.msra.mxu0 0.0
    %258 = vmatprep.subr.mxu0 0.0
    %259 = vmatpush2.msra.mxu0 0.0
    %260 = vmatprep.subr.mxu0 0.0
    %261 = vmatpush2.msra.mxu0 0.0
    %262 = vmatprep.subr.mxu0 0.0
    %263 = vmatpush2.msra.mxu0 0.0
    %264 = vmatprep.subr.mxu0 0.0
    %265 = vmatpush2.msra.mxu0 0.0
    %266 = vmatprep.subr.mxu0 0.0
    %267 = vmatpush2.msra.mxu0 0.0
    %268 = vmatprep.subr.mxu0 0.0
    %269 = vmatpush2.msra.mxu0 0.0
    %270 = vmatprep.subr.mxu0 0.0
    %271 = vmatpush2.msra.mxu0 0.0
    %272 = vmatprep.subr.mxu0 0.0
    %273 = vmatpush2.msra.mxu0 0.0
    %274 = vmatprep.subr.mxu0 0.0
    %275 = vmatpush2.msra.mxu0 0.0
    %276 = vmatprep.subr.mxu0 0.0
    %277 = vmatpush2.msra.mxu0 0.0
    %278 = vmatprep.subr.mxu0 0.0
    %279 = vmatpush2.msra.mxu0 0.0
    %280 = vmatprep.subr.mxu0 0.0
    %281 = vmatpush2.msra.mxu0 0.0
    %282 = vmatprep.subr.mxu0 0.0
    %283 = vmatpush2.msra.mxu0 0.0
    %284 = vmatprep.mubr.f32.mxu0 0.0
    %285 = vmatmul.mubr.f32.gmra.mxu0 %v198
    %v286 = vpop.f32.mrf.mxu0
    %v287 = vadd.f32 %v219, %v286
    %v288 = vpop.f32.mrf.mxu0
    %289 = vdwg.mxu0
    %290 = vst [vmem:[%s2] sm:$0xff] %v287
    // Predicated region
    $region14: #{pi_forward.1} parent=1 // pred_check
      _
    $region15: #{pi_forward.1} parent=1 // pred_check_branch
      %292 = sbr.rel (0) target = $region17
    $region16: #{pi_forward.1} parent=1 // pred_region
      _
    $region17: #{pi_forward.1} parent=1 // pred_fallthru
      _
    // Predicated region
    $region18: #{pi_forward.1} parent=1 // pred_check
      _
    $region19: #{pi_forward.1} parent=1 // pred_check_branch
      %294 = sbr.rel (0) target = $region21
    $region20: #{pi_forward.1} parent=1 // pred_region
      _
    $region21: #{pi_forward.1} parent=1 // pred_fallthru
      _
    %295 = vsyncpa [#allocation3], 1

</llo_original>
